<compile_context>
chip_gen: v5e
topology: v5e:2x2
jax: 0.10.0
libtpu: 0.0.40
codegen_flags: <defaults>
</compile_context>

<pallas_src>
import functools

import numpy as np
import jax
import jax.numpy as jnp
from jax.experimental import pallas as pl
from jax.experimental.pallas import tpu as pltpu


def _round_up(x, m):
    return ((x + m - 1) // m) * m


def _focal_kernel(logit_ref, target_ref, *rest, num_class, gamma, smooth, ts,
                  s_valid, has_alpha, mask_last):
    if has_alpha:
        alpha_ref, out_ref = rest
    else:
        (out_ref,) = rest

    si = pl.program_id(1)
    su = ts // 128                                        # 128-lane rows per tile

    @pl.when(si == 0)
    def _init():
        out_ref[...] = jnp.zeros_like(out_ref)

    t = target_ref[0]                                     # (su, 128) int32
    # Per-class (su, 128) slabs: class axis statically unrolled, spatial axis
    # dense over (sublane, lane) -> full (8,128) vregs for every VPU/EUP op.
    rows = [logit_ref[c].astype(jnp.float32) for c in range(num_class)]

    # softmax over the class axis, fused with the target / alpha gather
    m = rows[0]
    for c in range(1, num_class):
        m = jnp.maximum(m, rows[c])

    denom = None
    e_t = None
    alpha_t = None
    for c in range(num_class):
        ec = jnp.exp(rows[c] - m)
        denom = ec if denom is None else denom + ec
        sel = t == c
        e_t = jnp.where(sel, ec, jnp.float32(0.0) if e_t is None else e_t)
        if has_alpha:
            a_c = alpha_ref[c]                            # SMEM scalar read
            alpha_t = jnp.where(
                sel, a_c, jnp.float32(0.0) if alpha_t is None else alpha_t)

    pt = e_t * pl.reciprocal(denom) + jnp.float32(smooth)  # gathered prob + smooth
    logpt = jnp.log(pt)
    one_minus = jnp.float32(1.0) - pt
    if float(gamma).is_integer():
        focal = one_minus ** int(gamma)                   # integer_pow: ok if 1-pt < 0
    else:
        # Clamp to avoid NaN for fractional gamma (the PyTorch original would
        # NaN here because smooth can push pt above 1) -- documented deviation.
        focal = jnp.power(jnp.maximum(one_minus, jnp.float32(0.0)),
                          jnp.float32(gamma))

    w = focal * logpt                                     # per-element loss = -(alpha)*w
    if has_alpha:
        w = w * alpha_t

    def _accum(v):
        # Accumulate -v into the resident (8,128) output block with VPU adds
        # only (no per-step cross-lane reduction); wrapper does the final sum.
        g = su // 8
        rem = su - 8 * g
        if g:
            out_ref[...] -= jnp.sum(v[:8 * g].reshape(g, 8, 128), axis=0)
        if rem:
            out_ref[0:rem, :] -= v[8 * g:]

    if not mask_last:
        _accum(w)
    else:
        last = pl.num_programs(1) - 1

        @pl.when(si < last)
        def _full():
            _accum(w)

        @pl.when(si == last)
        def _tail():
            # Mask padded lanes and garbage rows of the ragged final block.
            sub = jax.lax.broadcasted_iota(jnp.int32, (su, 128), 0)
            lane = jax.lax.broadcasted_iota(jnp.int32, (su, 128), 1)
            pos = si * ts + sub * 128 + lane
            _accum(jnp.where(pos < s_valid, w, jnp.float32(0.0)))


def _pick_block_bytes():
    """Logit bytes per grid step: bigger on 128 MiB-VMEM chips (v5e/v6e),
    conservative on v7x (64 MiB VMEM per TensorCore)."""
    try:
        info = pltpu.get_tpu_info()
        vmem = getattr(info, "vmem_capacity_bytes", None)
        if vmem is not None and vmem >= 100 * 1024 * 1024:
            return 8 * 1024 * 1024
    except Exception:
        pass
    return 4 * 1024 * 1024


def focal_loss_ori(logit, target, *, alpha=None, gamma=2, ignore_index=None,
                   reduction='mean', smooth=1e-4, block_bytes=None):
    """JAX/Pallas equivalent of FocalLoss_Ori.forward (softmax + focal loss, mean)."""
    if ignore_index is not None:
        # TODO(synk): ignore_index masking (and its quirky mean normalisation in
        # the reference implementation) is not implemented; module default is None.
        raise NotImplementedError("ignore_index is not supported")
    if reduction != 'mean':
        # TODO(synk): reduction='none' (per-voxel loss map output) is not implemented.
        raise NotImplementedError("only reduction='mean' is supported")

    n, num_class = logit.shape[:2]

    # alpha handling (mirrors the module's __init__ branches)
    alpha_arr = None
    alpha_scale = None
    if alpha is None:
        pass                                              # ones -> weight 1
    elif isinstance(alpha, (int, float)) and not isinstance(alpha, bool):
        alpha_scale = float(alpha)                        # [alpha]*C -> constant weight
    else:
        alpha_arr = jnp.asarray(alpha, jnp.float32).reshape(-1)
        if alpha_arr.shape[0] != num_class:
            raise RuntimeError('the length not equal to number of class')
    has_alpha = alpha_arr is not None

    # Natural (N, C, S) view: no transpose / no HBM relayout, no wrapper upcast.
    logit3 = logit.reshape(n, num_class, -1)
    s_total = logit3.shape[-1]
    target3 = target.reshape(n, 1, -1).astype(jnp.int32)
    if target3.shape[-1] != s_total:
        raise ValueError('target size does not match logit spatial size')

    # Pad only to the next 128-lane boundary when S is ragged; tile raggedness
    # is handled with in-kernel masking, never a whole-tile pad.
    s128 = _round_up(s_total, 128)
    if s128 != s_total:
        # TODO(synk): this minimal pad still copies the arrays once in HBM; it is
        # only hit when S % 128 != 0.
        logit3 = jnp.pad(logit3, ((0, 0), (0, 0), (0, s128 - s_total)))
        target3 = jnp.pad(target3, ((0, 0), (0, 0), (0, s128 - s_total)))
    units = s128 // 128
    # Free row-major reshape -> sublane-dense (.., S//128, 128) layout.
    logit4 = logit3.reshape(n, num_class, units, 128)
    target4 = target3.reshape(n, 1, units, 128)

    # Spatial tile: su 128-lane rows per step; su is a multiple of 16 (dense for
    # f32 and bf16 packing) unless the whole spatial extent fits in one tile.
    if block_bytes is None:
        block_bytes = _pick_block_bytes()
    itemsize = jnp.dtype(logit.dtype).itemsize
    cap_units = max(16, (block_bytes // (num_class * itemsize * 128)) // 16 * 16)
    su = units if units <= cap_units else cap_units
    ts = su * 128
    num_s_tiles = (units + su - 1) // su
    mask_last = num_s_tiles * ts != s_total

    kernel = functools.partial(
        _focal_kernel, num_class=num_class, gamma=float(gamma),
        smooth=float(smooth), ts=ts, s_valid=s_total, has_alpha=has_alpha,
        mask_last=mask_last)

    in_specs = [
        pl.BlockSpec((None, num_class, su, 128), lambda b, s: (b, 0, s, 0)),
        pl.BlockSpec((None, 1, su, 128), lambda b, s: (b, 0, s, 0)),
    ]
    inputs = [logit4, target4]
    if has_alpha:
        in_specs.append(pl.BlockSpec(memory_space=pltpu.MemorySpace.SMEM))
        inputs.append(alpha_arr)

    vmem_limit = int(min(100 * 2**20, max(32 * 2**20, 6 * block_bytes + 16 * 2**20)))
    partials = pl.pallas_call(
        kernel,
        out_shape=jax.ShapeDtypeStruct((n, 8, 128), jnp.float32),
        grid_spec=pltpu.PrefetchScalarGridSpec(
            num_scalar_prefetch=0,
            grid=(n, num_s_tiles),
            in_specs=in_specs,
            out_specs=pl.BlockSpec((None, 8, 128), lambda b, s: (b, 0, 0)),
        ),
        compiler_params=pltpu.CompilerParams(
            dimension_semantics=("parallel", "arbitrary"),
            vmem_limit_bytes=vmem_limit,
        ),
    )(*inputs)

    loss_sum = jnp.sum(partials)                          # (n,8,128) partials -> total
    if alpha_scale is not None:
        loss_sum = loss_sum * jnp.float32(alpha_scale)
    return loss_sum / jnp.float32(n * s_total)            # reduction='mean'


def _focal_loss_ori_ref(logit, target, alpha_vec, gamma, smooth):
    """Pure-JAX reference mirroring FocalLoss_Ori.forward (ignore_index=None)."""
    n, c = logit.shape[:2]
    prob = jax.nn.softmax(logit.astype(jnp.float32), axis=1)
    prob = prob.reshape(n, c, -1).transpose(0, 2, 1).reshape(-1, c)
    t = target.reshape(-1).astype(jnp.int32)
    pt = jnp.take_along_axis(prob, t[:, None], axis=1)[:, 0] + smooth
    logpt = jnp.log(pt)
    alpha_t = alpha_vec[t]
    loss = -alpha_t * (1.0 - pt) ** gamma * logpt
    return loss.mean()


if __name__ == "__main__":
    key = jax.random.PRNGKey(0)
    k1, k2, k3, k4, k5, k6 = jax.random.split(key, 6)

    # Case 1: default config (alpha=None, gamma=2), spatial % 128 == 0 (no pad path).
    N, C, H, W = 2, 4, 16, 16
    logits = jax.random.normal(k1, (N, C, H, W), jnp.float32)
    target = jax.random.randint(k2, (N, H, W), 0, C, jnp.int32)
    out1 = jax.block_until_ready(focal_loss_ori(logits, target, gamma=2))
    ref1 = _focal_loss_ori_ref(logits, target, jnp.ones((C,), jnp.float32), 2, 1e-4)
    np.testing.assert_allclose(np.asarray(out1), np.asarray(ref1),
                               rtol=1e-5, atol=1e-6)

    # Case 2: per-class alpha + ragged spatial size (128-boundary pad + lane mask).
    N2, C2, H2, W2 = 2, 4, 15, 15
    logits2 = jax.random.normal(k3, (N2, C2, H2, W2), jnp.float32)
    target2 = jax.random.randint(k4, (N2, H2, W2), 0, C2, jnp.int32)
    alpha = [0.1, 0.2, 0.3, 0.4]
    out2 = jax.block_until_ready(
        focal_loss_ori(logits2, target2, alpha=alpha, gamma=2))
    ref2 = _focal_loss_ori_ref(logits2, target2, jnp.asarray(alpha, jnp.float32),
                               2, 1e-4)
    np.testing.assert_allclose(np.asarray(out2), np.asarray(ref2),
                               rtol=1e-5, atol=1e-6)

    # Case 3: multi-tile grid with a ragged (garbage-row) final block and scalar
    # alpha, using a tiny forced tile so several accumulation steps run.
    N3, C3, H3, W3 = 1, 4, 50, 100            # S = 5000 -> 40 rows, 3 tiles of 16 rows
    logits3 = jax.random.normal(k5, (N3, C3, H3, W3), jnp.float32)
    target3 = jax.random.randint(k6, (N3, H3, W3), 0, C3, jnp.int32)
    out3 = jax.block_until_ready(
        focal_loss_ori(logits3, target3, alpha=0.25, gamma=2,
                       block_bytes=32 * 1024))
    ref3 = _focal_loss_ori_ref(logits3, target3,
                               jnp.full((C3,), 0.25, jnp.float32), 2, 1e-4)
    np.testing.assert_allclose(np.asarray(out3), np.asarray(ref3),
                               rtol=2e-5, atol=1e-6)

    print("KERNEL_OK")
</pallas_src>

<mosaic_0001>
module attributes {stable_mosaic.version = 11 : i64} {
  func.func @_focal_kernel(%arg0: i32, %arg1: i32, %arg2: memref<1x4x2x128xf32, #tpu.memory_space<vmem>>, %arg3: memref<1x1x2x128xi32, #tpu.memory_space<vmem>>, %arg4: memref<1x8x128xf32, #tpu.memory_space<vmem>>) attributes {dimension_semantics = [#tpu.dimension_semantics<parallel>, #tpu.dimension_semantics<arbitrary>], iteration_bounds = array<i64: 2, 1>, scalar_prefetch = 0 : i64, scratch_operands = 0 : i64, tpu.core_type = #tpu.core_type<tc>, window_params = [{transform_indices = @transform_0, window_bounds = array<i64: 1, 4, 2, 128>}, {transform_indices = @transform_1, window_bounds = array<i64: 1, 1, 2, 128>}, {transform_indices = @transform_2, window_bounds = array<i64: 1, 8, 128>}]} {
    %c0_i32 = arith.constant 0 : i32
    %0 = arith.cmpi eq, %arg1, %c0_i32 : i32
    %1 = arith.extui %0 : i1 to i32
    %c0_i32_0 = arith.constant 0 : i32
    %2 = arith.cmpi ne, %1, %c0_i32_0 : i32
    scf.if %2 {
      %cst_26 = arith.constant 0.000000e+00 : f32
      %55 = vector.broadcast %cst_26 : f32 to vector<8x128xf32>
      %c0_27 = arith.constant 0 : index
      %c0_28 = arith.constant 0 : index
      %c0_29 = arith.constant 0 : index
      %56 = vector.load %arg4[%c0_27, %c0_28, %c0_29] : memref<1x8x128xf32, #tpu.memory_space<vmem>>, vector<1x8x128xf32>
      %57 = vector.shape_cast %56 : vector<1x8x128xf32> to vector<8x128xf32>
      %58 = vector.shape_cast %55 : vector<8x128xf32> to vector<1x8x128xf32>
      tpu.vector_store %arg4[%c0_27, %c0_28, %c0_29], %58 {strides = array<i32>} : memref<1x8x128xf32, #tpu.memory_space<vmem>>, vector<1x8x128xf32>,
    } else {
    }
    %c0 = arith.constant 0 : index
    %c0_1 = arith.constant 0 : index
    %c0_2 = arith.constant 0 : index
    %c0_3 = arith.constant 0 : index
    %3 = vector.load %arg3[%c0, %c0_1, %c0_2, %c0_3] : memref<1x1x2x128xi32, #tpu.memory_space<vmem>>, vector<1x1x2x128xi32>
    %4 = vector.shape_cast %3 : vector<1x1x2x128xi32> to vector<2x128xi32>
    %c0_4 = arith.constant 0 : index
    %c0_5 = arith.constant 0 : index
    %c0_6 = arith.constant 0 : index
    %c0_7 = arith.constant 0 : index
    %5 = vector.load %arg2[%c0_4, %c0_5, %c0_6, %c0_7] : memref<1x4x2x128xf32, #tpu.memory_space<vmem>>, vector<1x1x2x128xf32>
    %6 = vector.shape_cast %5 : vector<1x1x2x128xf32> to vector<2x128xf32>
    %c0_8 = arith.constant 0 : index
    %c1 = arith.constant 1 : index
    %c0_9 = arith.constant 0 : index
    %c0_10 = arith.constant 0 : index
    %7 = vector.load %arg2[%c0_8, %c1, %c0_9, %c0_10] : memref<1x4x2x128xf32, #tpu.memory_space<vmem>>, vector<1x1x2x128xf32>
    %8 = vector.shape_cast %7 : vector<1x1x2x128xf32> to vector<2x128xf32>
    %c0_11 = arith.constant 0 : index
    %c2 = arith.constant 2 : index
    %c0_12 = arith.constant 0 : index
    %c0_13 = arith.constant 0 : index
    %9 = vector.load %arg2[%c0_11, %c2, %c0_12, %c0_13] : memref<1x4x2x128xf32, #tpu.memory_space<vmem>>, vector<1x1x2x128xf32>
    %10 = vector.shape_cast %9 : vector<1x1x2x128xf32> to vector<2x128xf32>
    %c0_14 = arith.constant 0 : index
    %c3 = arith.constant 3 : index
    %c0_15 = arith.constant 0 : index
    %c0_16 = arith.constant 0 : index
    %11 = vector.load %arg2[%c0_14, %c3, %c0_15, %c0_16] : memref<1x4x2x128xf32, #tpu.memory_space<vmem>>, vector<1x1x2x128xf32>
    %12 = vector.shape_cast %11 : vector<1x1x2x128xf32> to vector<2x128xf32>
    %13 = arith.maximumf %6, %8 : vector<2x128xf32>
    %14 = arith.maximumf %13, %10 : vector<2x128xf32>
    %15 = arith.maximumf %14, %12 : vector<2x128xf32>
    %16 = arith.subf %6, %15 : vector<2x128xf32>
    %17 = math.exp %16 : vector<2x128xf32>
    %c0_i32_17 = arith.constant 0 : i32
    %18 = vector.broadcast %c0_i32_17 : i32 to vector<2x128xi32>
    %19 = arith.cmpi eq, %4, %18 : vector<2x128xi32>
    %cst = arith.constant 0.000000e+00 : f32
    %20 = vector.broadcast %cst : f32 to vector<2x128xf32>
    %21 = arith.select %19, %17, %20 : vector<2x128xi1>, vector<2x128xf32>
    %22 = arith.subf %8, %15 : vector<2x128xf32>
    %23 = math.exp %22 : vector<2x128xf32>
    %24 = arith.addf %17, %23 : vector<2x128xf32>
    %c1_i32 = arith.constant 1 : i32
    %25 = vector.broadcast %c1_i32 : i32 to vector<2x128xi32>
    %26 = arith.cmpi eq, %4, %25 : vector<2x128xi32>
    %27 = arith.select %26, %23, %21 : vector<2x128xi1>, vector<2x128xf32>
    %28 = arith.subf %10, %15 : vector<2x128xf32>
    %29 = math.exp %28 : vector<2x128xf32>
    %30 = arith.addf %24, %29 : vector<2x128xf32>
    %c2_i32 = arith.constant 2 : i32
    %31 = vector.broadcast %c2_i32 : i32 to vector<2x128xi32>
    %32 = arith.cmpi eq, %4, %31 : vector<2x128xi32>
    %33 = arith.select %32, %29, %27 : vector<2x128xi1>, vector<2x128xf32>
    %34 = arith.subf %12, %15 : vector<2x128xf32>
    %35 = math.exp %34 : vector<2x128xf32>
    %36 = arith.addf %30, %35 : vector<2x128xf32>
    %c3_i32 = arith.constant 3 : i32
    %37 = vector.broadcast %c3_i32 : i32 to vector<2x128xi32>
    %38 = arith.cmpi eq, %4, %37 : vector<2x128xi32>
    %39 = arith.select %38, %35, %33 : vector<2x128xi1>, vector<2x128xf32>
    %40 = tpu.reciprocal %36 : vector<2x128xf32> -> vector<2x128xf32>
    %41 = arith.mulf %39, %40 : vector<2x128xf32>
    %cst_18 = arith.constant 9.99999974E-5 : f32
    %42 = vector.broadcast %cst_18 : f32 to vector<2x128xf32>
    %43 = arith.addf %41, %42 : vector<2x128xf32>
    %44 = math.log %43 : vector<2x128xf32>
    %cst_19 = arith.constant 1.000000e+00 : f32
    %45 = vector.broadcast %cst_19 : f32 to vector<2x128xf32>
    %46 = arith.subf %45, %43 : vector<2x128xf32>
    %47 = arith.mulf %46, %46 : vector<2x128xf32>
    %48 = arith.mulf %47, %44 : vector<2x128xf32>
    %c0_20 = arith.constant 0 : index
    %c0_21 = arith.constant 0 : index
    %c0_22 = arith.constant 0 : index
    %49 = vector.load %arg4[%c0_20, %c0_21, %c0_22] : memref<1x8x128xf32, #tpu.memory_space<vmem>>, vector<1x2x128xf32>
    %50 = vector.shape_cast %49 : vector<1x2x128xf32> to vector<2x128xf32>
    %51 = arith.subf %50, %48 : vector<2x128xf32>
    %c0_23 = arith.constant 0 : index
    %c0_24 = arith.constant 0 : index
    %c0_25 = arith.constant 0 : index
    %52 = vector.load %arg4[%c0_23, %c0_24, %c0_25] : memref<1x8x128xf32, #tpu.memory_space<vmem>>, vector<1x2x128xf32>
    %53 = vector.shape_cast %52 : vector<1x2x128xf32> to vector<2x128xf32>
    %54 = vector.shape_cast %51 : vector<2x128xf32> to vector<1x2x128xf32>
    tpu.vector_store %arg4[%c0_23, %c0_24, %c0_25], %54 {strides = array<i32>} : memref<1x8x128xf32, #tpu.memory_space<vmem>>, vector<1x2x128xf32>,
    return
  }
  func.func @transform_0(%arg0: i32, %arg1: i32) -> (i32, i32, i32, i32) {
    %c0_i32 = arith.constant 0 : i32
    %c0_i32_0 = arith.constant 0 : i32
    %c0_i32_1 = arith.constant 0 : i32
    return %arg0, %c0_i32, %arg1, %c0_i32_0 : i32, i32, i32, i32
  }
  func.func @transform_1(%arg0: i32, %arg1: i32) -> (i32, i32, i32, i32) {
    %c0_i32 = arith.constant 0 : i32
    %c0_i32_0 = arith.constant 0 : i32
    %c0_i32_1 = arith.constant 0 : i32
    return %arg0, %c0_i32, %arg1, %c0_i32_0 : i32, i32, i32, i32
  }
  func.func @transform_2(%arg0: i32, %arg1: i32) -> (i32, i32, i32) {
    %c0_i32 = arith.constant 0 : i32
    %c0_i32_0 = arith.constant 0 : i32
    %c0_i32_1 = arith.constant 0 : i32
    return %arg0, %c0_i32, %c0_i32_0 : i32, i32, i32
  }
}

</mosaic_0001>

<llo_original>
// kernel: tpu_custom_call.1
$region0: #{tpu_custom_call.1}
  #allocation0 [shape = 'u32[]', space=smem, size = 0x4, offset = 0x4, fixed_abs, tag = 'smem constant byte address 0x4 - core index']
  #allocation1 [shape = 'u32[72,128]{1,0:T(1,128)}', space=vmem, size = 0x9000, scoped, tag = 'internal scratch']
  %s0 = inlined_call_operand.hbm [shape: f32[2,4,2,128], index: 0, kind: input, shape index: {}]
  %s1 = inlined_call_operand.hbm [shape: s32[2,1,2,128], index: 1, kind: input, shape index: {}]
  %s2 = inlined_call_operand.hbm [shape: f32[2,8,128], index: 2, kind: output, shape index: {}]
  %s3 = sld [smem:[#allocation0]]
  $region53: #{tpu_custom_call.1} parent=0
    _
  %s5 = ssub.s32 1, %s3
  %s6 = scalar_select 0, %s5, %s3
  $region1: #{tpu_custom_call.1} parent=0
    #allocation2 [shape = 'u8[8192]{0}', space=vmem, size = 0x2000, scoped, tag = 'input window, operand 0']
    #allocation3 [shape = 's32[2]{0}', space=sflag, size = 0x8, scoped, tag = 'scoped memory for tpu_custom_call.1']
    #allocation4 [shape = 's32[2]{0}', space=sflag, size = 0x8, scoped, tag = 'scoped memory for tpu_custom_call.1']
    #allocation5 [shape = 'u8[2048]{0}', space=vmem, size = 0x800, scoped, tag = 'input window, operand 1']
    #allocation6 [shape = 's32[2]{0}', space=sflag, size = 0x8, scoped, tag = 'scoped memory for tpu_custom_call.1']
    #allocation7 [shape = 'u8[8192]{0}', space=vmem, size = 0x2000, scoped, tag = 'output window, operand 0']
    %7 = vsyncpa [#allocation3], 0
    %s8 = scalar_lea.sflag [#allocation3], 1
    %9 = vsyncpa %s8, 0
    %10 = vsyncpa [#allocation6], 0
    %s11 = scalar_lea.sflag [#allocation6], 1
    %12 = vsyncpa %s11, 0
    %13 = vsyncpa [#allocation4], 0
    %s14 = scalar_lea.sflag [#allocation4], 1
    %15 = vsyncpa %s14, 0
    loop: start=0, step=1, limit=4
    $region2: #{tpu_custom_call.1} parent=1 // loop_pre_header
      _
    $region3: #{tpu_custom_call.1} parent=1 // loop_header
      %s17 = sphi 0, %s21
      %p18 = scmp.ge.s32.totalorder %s17, 4
      %s24 = sphi 0, %s36
      %s25 = sphi 0, %s32
      %s26 = sphi 0, %s24
      %s27 = sphi 0, %s25
      %s28 = sphi 0, %s26
      %s29 = sphi 0, %s27
      %s41 = sphi 0, %s43
      %s44 = sphi 0, %s41
      %s45 = sphi 0, %s44
      %s61 = sphi 0, %s45
      %s69 = sphi 0, %s71
      %s72 = sphi 0, %s69
      %s73 = sphi 0, %s72
      %s89 = sphi 0, %s73
      %s95 = sphi 0, %s97
      %s98 = sphi 0, %s95
      %s99 = sphi 0, %s98
      %s115 = sphi 0, %s99
    $region4: #{tpu_custom_call.1} parent=1 // loop_header_branch
      %20 = sbr.rel (%p18) target = $region8
    $region5: #{tpu_custom_call.1} parent=1 // loop_body
      %s22 = ssub.s32 %s17, 1
      %s23 = ssub.s32 %s17, 2
      %s30 = sadd.s32 1, %s25
      %p31 = scmp.ge.s32.totalorder %s30, 1
      %s32 = scalar_select %p31, 0, %s30
      %s33 = sadd.s32 1, %s24
      %s34 = scalar_select %p31, %s33, %s24
      %p35 = scmp.ge.s32.totalorder %s34, 2
      %s36 = scalar_select %p35, 0, %s34
      %s37 = ssub.s32 %s24, %s36
      %s38 = ssub.s32 %s25, %s32
      %s39 = sor.u32 %s37, %s38
      %p40 = scmp.eq.s32.totalorder %s39, 0
      %s42 = sadd.s32 %s41, 1
      %s43 = scalar_select %p40, %s41, %s42
      %p46 = pneg %p40
      %p47 = scmp.eq.s32.totalorder %s17, 1
      %p48 = por %p46, %p47
      %p49 = scmp.ne.s32.totalorder %s41, %s44
      %p50 = scmp.eq.s32.totalorder %s17, 0
      %p51 = por %p49, %p50
      %p52 = scmp.ne.s32.totalorder %s41, %s44
      %p53 = scmp.eq.s32.totalorder %s22, 1
      %p54 = por %p52, %p53
      %p55 = scmp.ne.s32.totalorder %s44, %s45
      %p56 = scmp.eq.s32.totalorder %s22, 0
      %p57 = por %p55, %p56
      %p58 = scmp.ne.s32.totalorder %s44, %s45
      %p59 = scmp.eq.s32.totalorder %s23, 1
      %p60 = por %p58, %p59
      %p62 = scmp.ne.s32.totalorder %s45, %s61
      %p63 = scmp.eq.s32.totalorder %s23, 0
      %p64 = por %p62, %p63
      %s65 = ssub.s32 %s24, %s36
      %s66 = ssub.s32 %s25, %s32
      %s67 = sor.u32 %s65, %s66
      %p68 = scmp.eq.s32.totalorder %s67, 0
      %s70 = sadd.s32 %s69, 1
      %s71 = scalar_select %p68, %s69, %s70
      %p74 = pneg %p68
      %p75 = scmp.eq.s32.totalorder %s17, 1
      %p76 = por %p74, %p75
      %p77 = scmp.ne.s32.totalorder %s69, %s72
      %p78 = scmp.eq.s32.totalorder %s17, 0
      %p79 = por %p77, %p78
      %p80 = scmp.ne.s32.totalorder %s69, %s72
      %p81 = scmp.eq.s32.totalorder %s22, 1
      %p82 = por %p80, %p81
      %p83 = scmp.ne.s32.totalorder %s72, %s73
      %p84 = scmp.eq.s32.totalorder %s22, 0
      %p85 = por %p83, %p84
      %p86 = scmp.ne.s32.totalorder %s72, %s73
      %p87 = scmp.eq.s32.totalorder %s23, 1
      %p88 = por %p86, %p87
      %p90 = scmp.ne.s32.totalorder %s73, %s89
      %p91 = scmp.eq.s32.totalorder %s23, 0
      %p92 = por %p90, %p91
      %s93 = ssub.s32 %s24, %s36
      %p94 = scmp.eq.s32.totalorder %s93, 0
      %s96 = sadd.s32 %s95, 1
      %s97 = scalar_select %p94, %s95, %s96
      %p100 = pneg %p94
      %p101 = scmp.eq.s32.totalorder %s17, 1
      %p102 = por %p100, %p101
      %p103 = scmp.ne.s32.totalorder %s95, %s98
      %p104 = scmp.eq.s32.totalorder %s17, 0
      %p105 = por %p103, %p104
      %p106 = scmp.ne.s32.totalorder %s95, %s98
      %p107 = scmp.eq.s32.totalorder %s22, 1
      %p108 = por %p106, %p107
      %p109 = scmp.ne.s32.totalorder %s98, %s99
      %p110 = scmp.eq.s32.totalorder %s22, 0
      %p111 = por %p109, %p110
      %p112 = scmp.ne.s32.totalorder %s98, %s99
      %p113 = scmp.eq.s32.totalorder %s23, 1
      %p114 = por %p112, %p113
      %p116 = scmp.ne.s32.totalorder %s99, %s115
      %p117 = scmp.eq.s32.totalorder %s23, 0
      %p118 = por %p116, %p117
      %p119 = scmp.le.s32.totalorder 1, %s17
      %p120 = scmp.lt.s32.totalorder %s17, 3
      %p121 = pnand %p119, %p120
      %p122 = pneg %p121
      // Predicated region
      $region9: #{tpu_custom_call.1} parent=5 // pred_check
        _
      $region10: #{tpu_custom_call.1} parent=5 // pred_check_branch
        %124 = sbr.rel (%p121) target = $region12
      $region11: #{tpu_custom_call.1} parent=5 // pred_region
        %s125 = ssub.s32 %s17, 1
      $region12: #{tpu_custom_call.1} parent=5 // pred_fallthru
        _
      %p126 = scmp.lt.s32.totalorder %s17, 2
      // Predicated region
      $region13: #{tpu_custom_call.1} parent=5 // pred_check
        %p127 = pneg %p126
      $region14: #{tpu_custom_call.1} parent=5 // pred_check_branch
        %129 = sbr.rel (%p127) target = $region16
      $region15: #{tpu_custom_call.1} parent=5 // pred_region
        // Predicated region
        $region17: #{tpu_custom_call.1} parent=15 // pred_check
          %p130 = pneg %p51
        $region18: #{tpu_custom_call.1} parent=15 // pred_check_branch
          %132 = sbr.rel (%p130) target = $region20
        $region19: #{tpu_custom_call.1} parent=15 // pred_region
          %s133 = sand.u32 %s41, 1
          %s134 = scalar_lea.sflag [#allocation3], %s133
          %s135 = sand.u32 %s41, 1
          %s136 = smul.addr %s135, 8
          %s137 = scalar_lea.vmem [#allocation2], %s136
          %139 = vsyncadd %s134, 0
          %s140 = smul.addr %s24, 4
          %s141 = sadd.s32 %s25, %s140
          %s142 = smul.addr %s141, 2
          %s143 = scalar_lea.hbm %s0, %s142
          %s144 = sshll.u32 %s143, 4
          %s145 = int_to_ptr.hbm [resolvable:$true] %s144
          %s146 = sshll.u32 %s137, 4
          %s147 = int_to_ptr.vmem [resolvable:$true] %s146
          %152 = dma.hbm_to_vmem [thread:$0]  %s145, 128, %s147, %s134, 32, 32, 2
        $region20: #{tpu_custom_call.1} parent=15 // pred_fallthru
          _
        // Predicated region
        $region21: #{tpu_custom_call.1} parent=15 // pred_check
          %p153 = pneg %p79
        $region22: #{tpu_custom_call.1} parent=15 // pred_check_branch
          %155 = sbr.rel (%p153) target = $region24
        $region23: #{tpu_custom_call.1} parent=15 // pred_region
          %s156 = sand.u32 %s69, 1
          %s157 = scalar_lea.sflag [#allocation6], %s156
          %s158 = sand.u32 %s69, 1
          %s159 = smul.addr %s158, 2
          %s160 = scalar_lea.vmem [#allocation5], %s159
          %162 = vsyncadd %s157, 0
          %s163 = sadd.s32 %s25, %s24
          %s164 = smul.addr %s163, 2
          %s165 = scalar_lea.hbm %s1, %s164
          %s167 = sshll.u32 %s165, 4
          %s168 = int_to_ptr.hbm [resolvable:$true] %s167
          %s169 = sshll.u32 %s160, 4
          %s170 = int_to_ptr.vmem [resolvable:$true] %s169
          %172 = dma.hbm_to_vmem [thread:$0]  %s168, 32, %s170, %s157
        $region24: #{tpu_custom_call.1} parent=15 // pred_fallthru
          _
      $region16: #{tpu_custom_call.1} parent=5 // pred_fallthru
        _
      %p173 = scmp.le.s32.totalorder 1, %s17
      %p174 = scmp.lt.s32.totalorder %s17, 3
      %p175 = pnand %p173, %p174
      %p176 = pneg %p175
      // Predicated region
      $region25: #{tpu_custom_call.1} parent=5 // pred_check
        _
      $region26: #{tpu_custom_call.1} parent=5 // pred_check_branch
        %178 = sbr.rel (%p175) target = $region28
      $region27: #{tpu_custom_call.1} parent=5 // pred_region
        %s179 = ssub.s32 %s17, 1
        %s180 = sand.u32 %s44, 1
        %s181 = scalar_lea.sflag [#allocation3], %s180
        %s182 = sand.u32 %s44, 1
        %s183 = smul.addr %s182, 8
        %s184 = scalar_lea.vmem [#allocation2], %s183
        // Predicated region
        $region29: #{tpu_custom_call.1} parent=27 // pred_check
          %p185 = pneg %p57
        $region30: #{tpu_custom_call.1} parent=27 // pred_check_branch
          %187 = sbr.rel (%p185) target = $region32
        $region31: #{tpu_custom_call.1} parent=27 // pred_region
          %189 = dma.done %s181, 128
        $region32: #{tpu_custom_call.1} parent=27 // pred_fallthru
          _
        %s190 = sand.u32 %s72, 1
        %s191 = scalar_lea.sflag [#allocation6], %s190
        %s192 = sand.u32 %s72, 1
        %s193 = smul.addr %s192, 2
        %s194 = scalar_lea.vmem [#allocation5], %s193
        // Predicated region
        $region33: #{tpu_custom_call.1} parent=27 // pred_check
          %p195 = pneg %p85
        $region34: #{tpu_custom_call.1} parent=27 // pred_check_branch
          %197 = sbr.rel (%p195) target = $region36
        $region35: #{tpu_custom_call.1} parent=27 // pred_region
          %199 = dma.done %s191, 32
        $region36: #{tpu_custom_call.1} parent=27 // pred_fallthru
          _
        %s200 = sand.u32 %s44, 1
        %s201 = scalar_lea.sflag [#allocation3], %s200
        %s202 = sand.u32 %s44, 1
        %s203 = smul.addr %s202, 8
        %s204 = scalar_lea.vmem [#allocation2], %s203
        %p205 = pneg %p57
        %p206 = pneg %p54
        %s207 = sand.u32 %s72, 1
        %s208 = scalar_lea.sflag [#allocation6], %s207
        %s209 = sand.u32 %s72, 1
        %s210 = smul.addr %s209, 2
        %s211 = scalar_lea.vmem [#allocation5], %s210
        %p212 = pneg %p85
        %p213 = pneg %p82
        %p214 = pneg %p111
        %p215 = pneg %p108
        %s216 = sand.u32 %s98, 1
        %s217 = scalar_lea.sflag [#allocation4], %s216
        %s218 = sand.u32 %s98, 1
        %s219 = smul.addr %s218, 8
        %s220 = scalar_lea.vmem [#allocation7], %s219
        %p221 = scmp.eq.s32.totalorder %s27, 0
        // Predicated region
        $region37: #{tpu_custom_call.1} parent=27 // pred_check
          %p222 = pneg %p221
        $region38: #{tpu_custom_call.1} parent=27 // pred_check_branch
          %224 = sbr.rel (%p222) target = $region40
        $region39: #{tpu_custom_call.1} parent=27 // pred_region
          %225 = vst [vmem:[%s220] sm:$0xff] 0.0
        $region40: #{tpu_custom_call.1} parent=27 // pred_fallthru
          _
        %v226 = vld [vmem:[%s194] sm:$0x3]
        %v227 = vld [vmem:[%s184] sm:$0x3]
        %s228 = scalar_lea.vmem %s184, 2 [#allocation2]
        %v229 = vld [vmem:[%s228] sm:$0x3]
        %s230 = scalar_lea.vmem %s184, 4 [#allocation2]
        %v231 = vld [vmem:[%s230] sm:$0x3]
        %s232 = scalar_lea.vmem %s184, 6 [#allocation2]
        %v233 = vld [vmem:[%s232] sm:$0x3]
        %v234 = vmax.f32 %v227, %v229
        %v235 = vmax.f32 %v234, %v231
        %v236 = vmax.f32 %v235, %v233
        %v237 = vsub.f32 %v227, %v236
        %v238 = vmul.f32 %v237, 1.442695
        %v239 = vpow.pop %v238
        %vm240 = vcmp.eq.s32.totalorder %v226, 0
        %v241 = vsel %vm240, %v239, 0.0
        %v242 = vsub.f32 %v229, %v236
        %v243 = vmul.f32 %v242, 1.442695
        %v244 = vpow.pop %v243
        %v245 = vadd.f32 %v239, %v244
        %vm246 = vcmp.eq.s32.totalorder %v226, 1
        %v247 = vsel %vm246, %v244, %v241
        %v248 = vsub.f32 %v231, %v236
        %v249 = vmul.f32 %v248, 1.442695
        %v250 = vpow.pop %v249
        %v251 = vadd.f32 %v245, %v250
        %vm252 = vcmp.eq.s32.totalorder %v226, 2
        %v253 = vsel %vm252, %v250, %v247
        %v254 = vsub.f32 %v233, %v236
        %v255 = vmul.f32 %v254, 1.442695
        %v256 = vpow.pop %v255
        %v257 = vadd.f32 %v251, %v256
        %vm258 = vcmp.eq.s32.totalorder %v226, 3
        %v259 = vsel %vm258, %v256, %v253
        %v260 = vrcp.pop %v257
        %v261 = vmul.f32 %v257, %v260
        %v262 = vsub.f32 1.0, %v261
        %v263 = vmul.f32 %v260, %v262
        %v264 = vadd.f32 %v260, %v263
        %vm265 = vweird.f32 %v257
        %vm266 = vweird.f32 %v260
        %vm267 = vmor %vm265, %vm266
        %v268 = vsel %vm267, %v260, %v264
        %v269 = vand.u32 2147483647, %v257
        %vm270 = vcmp.eq.f32.partialorder %v269, 8.507059e+37
        %v271 = vand.u32 %v257, 2147483648
        %v272 = vor.u32 1.1754944e-38, %v271
        %v273 = vsel %vm270, %v272, %v268
        %v274 = vmul.f32 %v259, %v273
        %v275 = vadd.f32 %v274, 0.0001
        %v276 = vlog2.pop %v275
        %v277 = vmul.f32 %v276, 0.6931472
        %v278 = vsub.f32 1.0, %v275
        %v279 = vmul.f32 %v278, %v278
        %v280 = vmul.f32 %v279, %v277
        %v281 = vld [vmem:[%s220] sm:$0x3]
        %v282 = vsub.f32 %v281, %v280
        %283 = vst [vmem:[%s220] sm:$0x3] %v282
        %s284 = sand.u32 %s98, 1
        %s285 = scalar_lea.sflag [#allocation4], %s284
        %s286 = sand.u32 %s98, 1
        %s287 = smul.addr %s286, 8
        %s288 = scalar_lea.vmem [#allocation7], %s287
        // Predicated region
        $region41: #{tpu_custom_call.1} parent=27 // pred_check
          %p289 = pneg %p108
        $region42: #{tpu_custom_call.1} parent=27 // pred_check_branch
          %291 = sbr.rel (%p289) target = $region44
        $region43: #{tpu_custom_call.1} parent=27 // pred_region
          %293 = vsyncadd %s285, 0
          %s294 = smul.addr %s26, 8
          %s295 = scalar_lea.hbm %s2, %s294
          %s297 = sshll.u32 %s288, 4
          %s298 = int_to_ptr.vmem [resolvable:$true] %s297
          %s299 = sshll.u32 %s295, 4
          %s300 = int_to_ptr.hbm [resolvable:$true] %s299
          %302 = dma.vmem_to_hbm [thread:$0]  %s298, 128, %s300, %s285
        $region44: #{tpu_custom_call.1} parent=27 // pred_fallthru
          _
      $region28: #{tpu_custom_call.1} parent=5 // pred_fallthru
        _
      %p303 = scmp.le.s32.totalorder 2, %s17
      // Predicated region
      $region45: #{tpu_custom_call.1} parent=5 // pred_check
        %p304 = pneg %p303
      $region46: #{tpu_custom_call.1} parent=5 // pred_check_branch
        %306 = sbr.rel (%p304) target = $region48
      $region47: #{tpu_custom_call.1} parent=5 // pred_region
        %s307 = ssub.s32 %s17, 2
        // Predicated region
        $region49: #{tpu_custom_call.1} parent=47 // pred_check
          %p308 = pneg %p114
        $region50: #{tpu_custom_call.1} parent=47 // pred_check_branch
          %310 = sbr.rel (%p308) target = $region52
        $region51: #{tpu_custom_call.1} parent=47 // pred_region
          %s311 = sand.u32 %s99, 1
          %s312 = scalar_lea.sflag [#allocation4], %s311
          %s313 = sand.u32 %s99, 1
          %s314 = smul.addr %s313, 8
          %s315 = scalar_lea.vmem [#allocation7], %s314
          %317 = dma.done %s312, 128
        $region52: #{tpu_custom_call.1} parent=47 // pred_fallthru
          _
      $region48: #{tpu_custom_call.1} parent=5 // pred_fallthru
        _
    $region6: #{tpu_custom_call.1} parent=1 // loop_footer
      %s21 = sadd.s32 1, %s17
    $region7: #{tpu_custom_call.1} parent=1 // loop_footer_branch
      %16 = sbr.rel target = $region3
    $region8: #{tpu_custom_call.1} parent=1 // loop_exit
      _
    %318 = vsyncpa [#allocation3], 1
    %s319 = scalar_lea.sflag [#allocation3], 1
    %320 = vsyncpa %s319, 1
    %321 = vsyncpa [#allocation6], 1
    %s322 = scalar_lea.sflag [#allocation6], 1
    %323 = vsyncpa %s322, 1
    %324 = vsyncpa [#allocation4], 1
    %s325 = scalar_lea.sflag [#allocation4], 1
    %326 = vsyncpa %s325, 1

</llo_original>
